<compile_context>
chip_gen: v7x
topology: tpu7x:2x2x1
jax: 0.10.0
libtpu: 0.0.40
codegen_flags: <defaults>
</compile_context>

<pallas_src>
import functools

import jax
import jax.numpy as jnp
from jax.experimental import pallas as pl
from jax.experimental.pallas import tpu as pltpu

BN_EPS = 1e-5

# Rows of the packed (8, H) parameter slab.
_ROW_W1, _ROW_G1, _ROW_BE1, _ROW_G2, _ROW_BE2, _ROW_W3, _ROW_B3 = 0, 1, 2, 3, 4, 5, 6


def mynet_kernel(x_ref, wip_ref, w2_ref, pk_ref, o_ref,
                 r_scr, rsum_scr, rsq_scr, s2_scr, ss2_scr, *, inv_b):
    p = pl.program_id(0)   # phase: 0 = r + r-stats, 1 = BN2-stats, 2 = finalize
    t = pl.program_id(1)   # batch tile

    @pl.when(jnp.logical_and(p == 0, t == 0))
    def _init():
        rsum_scr[...] = jnp.zeros_like(rsum_scr)
        rsq_scr[...] = jnp.zeros_like(rsq_scr)
        s2_scr[...] = jnp.zeros_like(s2_scr)
        ss2_scr[...] = jnp.zeros_like(ss2_scr)

    # ---- phase 0: InnerProduct (VPU mul + XLU lane reduce) + scalar r stats ----
    @pl.when(p == 0)
    def _phase0():
        r = jnp.sum(x_ref[...] * wip_ref[...], axis=-1, keepdims=True)   # (tile_b, 1)
        r_scr[t] = r
        rsum_scr[...] += jnp.sum(r, axis=0, keepdims=True)
        rsq_scr[...] += jnp.sum(r * r, axis=0, keepdims=True)

    def _h1_z2():
        # BN1 folded algebraically: z1 = r*w1 (+b1) is rank-1, so per channel
        #   mean_1 = mean(r)*w1 + b1  (b1 cancels),  var_1 = var(r) * w1^2.
        # Only scalar r statistics cross the tile boundary.
        r = r_scr[t]                                        # (tile_b, 1)
        mean_r = rsum_scr[...] * inv_b                      # (1, 1)
        var_r = rsq_scr[...] * inv_b - mean_r * mean_r      # (1, 1)
        w1 = pk_ref[_ROW_W1:_ROW_W1 + 1, :]
        g1 = pk_ref[_ROW_G1:_ROW_G1 + 1, :]
        be1 = pk_ref[_ROW_BE1:_ROW_BE1 + 1, :]
        scale1 = w1 * g1 * jax.lax.rsqrt(w1 * w1 * var_r + BN_EPS)       # (1, H)
        h1 = jnp.maximum((r - mean_r) * scale1 + be1, 0.0)               # (tile_b, H)
        # The only genuinely 2-D product stays on the MXU (b2 cancels under BN2).
        return jnp.dot(h1, w2_ref[...], preferred_element_type=jnp.float32)

    # ---- phase 1: accumulate BN2 per-channel sum / sum-of-squares ----
    @pl.when(p == 1)
    def _phase1():
        z2 = _h1_z2()
        s2_scr[...] += jnp.sum(z2, axis=0, keepdims=True)
        ss2_scr[...] += jnp.sum(z2 * z2, axis=0, keepdims=True)

    # ---- phase 2: BN2 + ReLU + Linear(H->1), write the output tile ----
    @pl.when(p == 2)
    def _phase2():
        z2 = _h1_z2()
        g2 = pk_ref[_ROW_G2:_ROW_G2 + 1, :]
        be2 = pk_ref[_ROW_BE2:_ROW_BE2 + 1, :]
        w3 = pk_ref[_ROW_W3:_ROW_W3 + 1, :]
        b3 = pk_ref[_ROW_B3:_ROW_B3 + 1, 0:1]               # (1, 1)
        mu2 = s2_scr[...] * inv_b
        var2 = ss2_scr[...] * inv_b - mu2 * mu2             # biased (training-mode BN)
        a2 = g2 * jax.lax.rsqrt(var2 + BN_EPS)
        c2 = be2 - mu2 * a2
        h2 = jnp.maximum(z2 * a2 + c2, 0.0)                 # (tile_b, H)
        y = jnp.sum(h2 * w3, axis=-1, keepdims=True) + b3   # (tile_b, 1)
        o_ref[...] = y.astype(o_ref.dtype)


def pack_params(params):
    """Pack per-channel vectors + scalar b3 into one (8, H) slab."""
    H = params["w2"].shape[0]
    packed = jnp.zeros((8, H), jnp.float32)
    packed = packed.at[_ROW_W1].set(params["w1"][0])       # Linear(1->H) weight row
    packed = packed.at[_ROW_G1].set(params["g1"][0])
    packed = packed.at[_ROW_BE1].set(params["be1"][0])
    packed = packed.at[_ROW_G2].set(params["g2"][0])
    packed = packed.at[_ROW_BE2].set(params["be2"][0])
    packed = packed.at[_ROW_W3].set(params["w3"][:, 0])     # Linear(H->1) weight row
    packed = packed.at[_ROW_B3, 0].set(params["b3"][0, 0])  # scalar bias
    wip_row = params["wip"].reshape(1, -1)                  # (1, in_dim), elem 0 == 1.0
    return wip_row, params["w2"], packed


def _choose_tile_b(B, in_dim, hidden, vmem_budget_bytes=40 * 1024 * 1024):
    """Largest batch tile (multiple of 8, divides B) fitting a v7x-safe VMEM budget.

    Rough per-row cost: double-buffered x rows + live (tile_b, H) temporaries
    (h1/z2/h2) + the lane-padded r-cache row.  Sized against ~40 MiB so the same
    tile fits v7x (64 MiB physical) as well as v5e/v6e (128 MiB).
    """
    assert B % 8 == 0, "batch must be a multiple of 8 (sublane tiling)"
    per_row = 4 * (2 * in_dim + 4 * max(hidden, 128) + 128)
    t = max(8, min(1024, vmem_budget_bytes // per_row, B))
    t -= t % 8
    while B % t:
        t -= 8
    return t


def mynet_forward(x, params, tile_b=None):
    """x: (B, in_dim) float32.  params: dict from init_params (out_dim must be 1)."""
    B, in_dim = x.shape
    H = params["w2"].shape[0]
    out_dim = params["w3"].shape[1]
    assert out_dim == 1, "fused kernel is specialized to out_dim == 1"
    assert params["wip"].shape[0] == in_dim

    if tile_b is None:
        tile_b = _choose_tile_b(B, in_dim, H)
    assert B % tile_b == 0 and tile_b % 8 == 0
    num_tiles = B // tile_b

    wip_row, w2, packed = pack_params(params)
    kernel = functools.partial(mynet_kernel, inv_b=1.0 / float(B))

    # x is only needed in phase 0; freeze its block index afterwards so HBM
    # traffic for the big tensor is exactly one pass.  The output block index
    # only advances in phase 2, so each output block is written exactly once.
    x_spec = pl.BlockSpec((tile_b, in_dim),
                          lambda p, t: (jnp.where(p == 0, t, 0), 0))
    out_spec = pl.BlockSpec((tile_b, 1),
                            lambda p, t: (jnp.where(p == 2, t, 0), 0))

    def full(shape):
        return pl.BlockSpec(shape, lambda p, t: (0, 0))

    return pl.pallas_call(
        kernel,
        out_shape=jax.ShapeDtypeStruct((B, out_dim), jnp.float32),
        grid_spec=pltpu.PrefetchScalarGridSpec(
            num_scalar_prefetch=0,
            grid=(3, num_tiles),
            in_specs=[x_spec, full((1, in_dim)), full((H, H)), full((8, H))],
            out_specs=out_spec,
            scratch_shapes=[
                pltpu.VMEM((num_tiles, tile_b, 1), jnp.float32),  # cached r
                pltpu.VMEM((1, 1), jnp.float32),                  # sum(r)
                pltpu.VMEM((1, 1), jnp.float32),                  # sum(r^2)
                pltpu.VMEM((1, H), jnp.float32),                  # sum(z2) per channel
                pltpu.VMEM((1, H), jnp.float32),                  # sum(z2^2) per channel
            ]),
        compiler_params=pltpu.CompilerParams(
            # Both axes sequential: phase ordering + BN accumulators require it.
            dimension_semantics=("arbitrary", "arbitrary"),
            # Explicit scoped-VMEM limit so v5e's 16 MiB / v6e's 32 MiB defaults
            # never force a smaller tile than the budget above allows.
            vmem_limit_bytes=64 * 1024 * 1024),
    )(x, wip_row, w2, packed)


def init_params(key, in_dim=64, out_dim=1, hidden_dim=32):
    """Deterministic parameters matching the PyTorch module's shapes."""
    ks = jax.random.split(key, 4)

    # InnerProductLayer: element 0 fixed at 1.0, rest learnable (small random so
    # the compute is non-trivial; the PyTorch init is zeros).
    w_learnable = 0.1 * jax.random.normal(ks[0], (in_dim - 1,), jnp.float32)
    wip = jnp.concatenate([jnp.ones((1,), jnp.float32), w_learnable])

    def linear(k, fan_in, fan_out):
        kw, kb = jax.random.split(k)
        bound = 1.0 / jnp.sqrt(float(fan_in))
        w = jax.random.uniform(kw, (fan_in, fan_out), jnp.float32, -bound, bound)
        b = jax.random.uniform(kb, (1, fan_out), jnp.float32, -bound, bound)
        return w, b

    w1, b1 = linear(ks[1], 1, hidden_dim)
    w2, b2 = linear(ks[2], hidden_dim, hidden_dim)
    w3, b3 = linear(ks[3], hidden_dim, out_dim)

    g1 = jnp.ones((1, hidden_dim), jnp.float32)
    be1 = jnp.zeros((1, hidden_dim), jnp.float32)
    g2 = jnp.ones((1, hidden_dim), jnp.float32)
    be2 = jnp.zeros((1, hidden_dim), jnp.float32)

    return dict(wip=wip, w1=w1, b1=b1, g1=g1, be1=be1,
                w2=w2, b2=b2, g2=g2, be2=be2, w3=w3, b3=b3)


def mynet_reference(x, p):
    """Pure-JAX reference with full PyTorch training-mode semantics (incl. b1/b2)."""
    r = x @ p["wip"].reshape(-1, 1)
    z1 = r @ p["w1"] + p["b1"]
    mu, var = jnp.mean(z1, 0, keepdims=True), jnp.var(z1, 0, keepdims=True)
    h1 = jnp.maximum((z1 - mu) / jnp.sqrt(var + BN_EPS) * p["g1"] + p["be1"], 0.0)
    z2 = h1 @ p["w2"] + p["b2"]
    mu, var = jnp.mean(z2, 0, keepdims=True), jnp.var(z2, 0, keepdims=True)
    h2 = jnp.maximum((z2 - mu) / jnp.sqrt(var + BN_EPS) * p["g2"] + p["be2"], 0.0)
    return h2 @ p["w3"] + p["b3"]


if __name__ == "__main__":
    key = jax.random.PRNGKey(0)
    kx, kp = jax.random.split(key)

    B, IN_DIM, OUT_DIM, HIDDEN = 32, 64, 1, 32
    x = jax.random.normal(kx, (B, IN_DIM), jnp.float32)
    params = init_params(kp, in_dim=IN_DIM, out_dim=OUT_DIM, hidden_dim=HIDDEN)

    ref = mynet_reference(x, params)

    # Multi-tile path: exercises the 3-phase BN-aware grid with 2 batch tiles.
    out = mynet_forward(x, params, tile_b=16)
    jax.block_until_ready(out)
    assert out.shape == (B, OUT_DIM)
    assert jnp.allclose(out, ref, atol=1e-4, rtol=1e-4), "kernel/reference mismatch (tiled)"

    # Single-tile path: auto tile-size selection.
    out1 = mynet_forward(x, params)
    jax.block_until_ready(out1)
    assert jnp.allclose(out1, ref, atol=1e-4, rtol=1e-4), "kernel/reference mismatch (auto)"

    print("KERNEL_OK")
</pallas_src>

<mosaic_0001>
module attributes {stable_mosaic.version = 11 : i64} {
  func.func @mynet_kernel(%arg0: i32, %arg1: i32, %arg2: memref<16x64xf32, #tpu.memory_space<vmem>>, %arg3: memref<1x64xf32, #tpu.memory_space<vmem>>, %arg4: memref<32x32xf32, #tpu.memory_space<vmem>>, %arg5: memref<8x32xf32, #tpu.memory_space<vmem>>, %arg6: memref<16x1xf32, #tpu.memory_space<vmem>>, %arg7: memref<2x16x1xf32, #tpu.memory_space<vmem>>, %arg8: memref<1x1xf32, #tpu.memory_space<vmem>>, %arg9: memref<1x1xf32, #tpu.memory_space<vmem>>, %arg10: memref<1x32xf32, #tpu.memory_space<vmem>>, %arg11: memref<1x32xf32, #tpu.memory_space<vmem>>) attributes {dimension_semantics = [#tpu.dimension_semantics<arbitrary>, #tpu.dimension_semantics<arbitrary>], iteration_bounds = array<i64: 3, 2>, scalar_prefetch = 0 : i64, scratch_operands = 5 : i64, tpu.core_type = #tpu.core_type<tc>, window_params = [{transform_indices = @transform_0, window_bounds = array<i64: 16, 64>}, {pipeline_mode = #tpu.pipeline_mode<synchronous>, transform_indices = @transform_1, window_bounds = array<i64: 1, 64>}, {pipeline_mode = #tpu.pipeline_mode<synchronous>, transform_indices = @transform_2, window_bounds = array<i64: 32, 32>}, {pipeline_mode = #tpu.pipeline_mode<synchronous>, transform_indices = @transform_3, window_bounds = array<i64: 8, 32>}, {transform_indices = @transform_4, window_bounds = array<i64: 16, 1>}]} {
    %c0_i32 = arith.constant 0 : i32
    %0 = arith.cmpi eq, %arg0, %c0_i32 : i32
    %c0_i32_0 = arith.constant 0 : i32
    %1 = arith.cmpi eq, %arg1, %c0_i32_0 : i32
    %2 = arith.andi %0, %1 : i1
    %3 = arith.extui %2 : i1 to i32
    %c0_i32_1 = arith.constant 0 : i32
    %4 = arith.cmpi ne, %3, %c0_i32_1 : i32
    scf.if %4 {
      %cst = arith.constant 0.000000e+00 : f32
      %14 = vector.broadcast %cst : f32 to vector<1x1xf32>
      %c0 = arith.constant 0 : index
      %c0_6 = arith.constant 0 : index
      %15 = vector.load %arg8[%c0, %c0_6] : memref<1x1xf32, #tpu.memory_space<vmem>>, vector<1x1xf32>
      tpu.vector_store %arg8[%c0, %c0_6], %14 {strides = array<i32>} : memref<1x1xf32, #tpu.memory_space<vmem>>, vector<1x1xf32>,
      %cst_7 = arith.constant 0.000000e+00 : f32
      %16 = vector.broadcast %cst_7 : f32 to vector<1x1xf32>
      %c0_8 = arith.constant 0 : index
      %c0_9 = arith.constant 0 : index
      %17 = vector.load %arg9[%c0_8, %c0_9] : memref<1x1xf32, #tpu.memory_space<vmem>>, vector<1x1xf32>
      tpu.vector_store %arg9[%c0_8, %c0_9], %16 {strides = array<i32>} : memref<1x1xf32, #tpu.memory_space<vmem>>, vector<1x1xf32>,
      %cst_10 = arith.constant 0.000000e+00 : f32
      %18 = vector.broadcast %cst_10 : f32 to vector<1x32xf32>
      %c0_11 = arith.constant 0 : index
      %c0_12 = arith.constant 0 : index
      %19 = vector.load %arg10[%c0_11, %c0_12] : memref<1x32xf32, #tpu.memory_space<vmem>>, vector<1x32xf32>
      tpu.vector_store %arg10[%c0_11, %c0_12], %18 {strides = array<i32>} : memref<1x32xf32, #tpu.memory_space<vmem>>, vector<1x32xf32>,
      %cst_13 = arith.constant 0.000000e+00 : f32
      %20 = vector.broadcast %cst_13 : f32 to vector<1x32xf32>
      %c0_14 = arith.constant 0 : index
      %c0_15 = arith.constant 0 : index
      %21 = vector.load %arg11[%c0_14, %c0_15] : memref<1x32xf32, #tpu.memory_space<vmem>>, vector<1x32xf32>
      tpu.vector_store %arg11[%c0_14, %c0_15], %20 {strides = array<i32>} : memref<1x32xf32, #tpu.memory_space<vmem>>, vector<1x32xf32>,
    } else {
    }
    %c0_i32_2 = arith.constant 0 : i32
    %5 = arith.cmpi eq, %arg0, %c0_i32_2 : i32
    %6 = arith.extui %5 : i1 to i32
    %c0_i32_3 = arith.constant 0 : i32
    %7 = arith.cmpi ne, %6, %c0_i32_3 : i32
    scf.if %7 {
      %c0 = arith.constant 0 : index
      %c0_6 = arith.constant 0 : index
      %14 = vector.load %arg2[%c0, %c0_6] : memref<16x64xf32, #tpu.memory_space<vmem>>, vector<16x64xf32>
      %c0_7 = arith.constant 0 : index
      %c0_8 = arith.constant 0 : index
      %15 = vector.load %arg3[%c0_7, %c0_8] : memref<1x64xf32, #tpu.memory_space<vmem>>, vector<1x64xf32>
      %16 = vector.broadcast %15 : vector<1x64xf32> to vector<16x64xf32>
      %17 = arith.mulf %14, %16 : vector<16x64xf32>
      %cst = arith.constant dense<0.000000e+00> : vector<16xf32>
      %18 = vector.multi_reduction <add>, %17, %cst [1] : vector<16x64xf32> to vector<16xf32>
      %19 = vector.shape_cast %18 : vector<16xf32> to vector<16x1xf32>
      %20 = arith.index_cast %arg1 : i32 to index
      %c0_9 = arith.constant 0 : index
      %c0_10 = arith.constant 0 : index
      %21 = vector.load %arg7[%20, %c0_9, %c0_10] : memref<2x16x1xf32, #tpu.memory_space<vmem>>, vector<1x16x1xf32>
      %22 = vector.shape_cast %21 : vector<1x16x1xf32> to vector<16x1xf32>
      %23 = vector.shape_cast %19 : vector<16x1xf32> to vector<1x16x1xf32>
      tpu.vector_store %arg7[%20, %c0_9, %c0_10], %23 {strides = array<i32>} : memref<2x16x1xf32, #tpu.memory_space<vmem>>, vector<1x16x1xf32>,
      %c0_11 = arith.constant 0 : index
      %c0_12 = arith.constant 0 : index
      %24 = vector.load %arg8[%c0_11, %c0_12] : memref<1x1xf32, #tpu.memory_space<vmem>>, vector<1x1xf32>
      %cst_13 = arith.constant dense<0.000000e+00> : vector<1xf32>
      %25 = vector.multi_reduction <add>, %19, %cst_13 [0] : vector<16x1xf32> to vector<1xf32>
      %26 = vector.shape_cast %25 : vector<1xf32> to vector<1x1xf32>
      %27 = arith.addf %24, %26 : vector<1x1xf32>
      %c0_14 = arith.constant 0 : index
      %c0_15 = arith.constant 0 : index
      %28 = vector.load %arg8[%c0_14, %c0_15] : memref<1x1xf32, #tpu.memory_space<vmem>>, vector<1x1xf32>
      tpu.vector_store %arg8[%c0_14, %c0_15], %27 {strides = array<i32>} : memref<1x1xf32, #tpu.memory_space<vmem>>, vector<1x1xf32>,
      %c0_16 = arith.constant 0 : index
      %c0_17 = arith.constant 0 : index
      %29 = vector.load %arg9[%c0_16, %c0_17] : memref<1x1xf32, #tpu.memory_space<vmem>>, vector<1x1xf32>
      %30 = arith.mulf %19, %19 : vector<16x1xf32>
      %cst_18 = arith.constant dense<0.000000e+00> : vector<1xf32>
      %31 = vector.multi_reduction <add>, %30, %cst_18 [0] : vector<16x1xf32> to vector<1xf32>
      %32 = vector.shape_cast %31 : vector<1xf32> to vector<1x1xf32>
      %33 = arith.addf %29, %32 : vector<1x1xf32>
      %c0_19 = arith.constant 0 : index
      %c0_20 = arith.constant 0 : index
      %34 = vector.load %arg9[%c0_19, %c0_20] : memref<1x1xf32, #tpu.memory_space<vmem>>, vector<1x1xf32>
      tpu.vector_store %arg9[%c0_19, %c0_20], %33 {strides = array<i32>} : memref<1x1xf32, #tpu.memory_space<vmem>>, vector<1x1xf32>,
    } else {
    }
    %c1_i32 = arith.constant 1 : i32
    %8 = arith.cmpi eq, %arg0, %c1_i32 : i32
    %9 = arith.extui %8 : i1 to i32
    %c0_i32_4 = arith.constant 0 : i32
    %10 = arith.cmpi ne, %9, %c0_i32_4 : i32
    scf.if %10 {
      %14 = arith.index_cast %arg1 : i32 to index
      %c0 = arith.constant 0 : index
      %c0_6 = arith.constant 0 : index
      %15 = vector.load %arg7[%14, %c0, %c0_6] : memref<2x16x1xf32, #tpu.memory_space<vmem>>, vector<1x16x1xf32>
      %16 = vector.shape_cast %15 : vector<1x16x1xf32> to vector<16x1xf32>
      %c0_7 = arith.constant 0 : index
      %c0_8 = arith.constant 0 : index
      %17 = vector.load %arg8[%c0_7, %c0_8] : memref<1x1xf32, #tpu.memory_space<vmem>>, vector<1x1xf32>
      %cst = arith.constant 3.125000e-02 : f32
      %18 = vector.broadcast %cst : f32 to vector<1x1xf32>
      %19 = arith.mulf %17, %18 : vector<1x1xf32>
      %c0_9 = arith.constant 0 : index
      %c0_10 = arith.constant 0 : index
      %20 = vector.load %arg9[%c0_9, %c0_10] : memref<1x1xf32, #tpu.memory_space<vmem>>, vector<1x1xf32>
      %cst_11 = arith.constant 3.125000e-02 : f32
      %21 = vector.broadcast %cst_11 : f32 to vector<1x1xf32>
      %22 = arith.mulf %20, %21 : vector<1x1xf32>
      %23 = arith.mulf %19, %19 : vector<1x1xf32>
      %24 = arith.subf %22, %23 : vector<1x1xf32>
      %c0_12 = arith.constant 0 : index
      %c0_13 = arith.constant 0 : index
      %25 = vector.load %arg5[%c0_12, %c0_13] : memref<8x32xf32, #tpu.memory_space<vmem>>, vector<1x32xf32>
      %c1 = arith.constant 1 : index
      %c0_14 = arith.constant 0 : index
      %26 = vector.load %arg5[%c1, %c0_14] : memref<8x32xf32, #tpu.memory_space<vmem>>, vector<1x32xf32>
      %c2 = arith.constant 2 : index
      %c0_15 = arith.constant 0 : index
      %27 = vector.load %arg5[%c2, %c0_15] : memref<8x32xf32, #tpu.memory_space<vmem>>, vector<1x32xf32>
      %28 = arith.mulf %25, %26 : vector<1x32xf32>
      %29 = arith.mulf %25, %25 : vector<1x32xf32>
      %30 = vector.broadcast %24 : vector<1x1xf32> to vector<1x32xf32>
      %31 = arith.mulf %29, %30 : vector<1x32xf32>
      %cst_16 = arith.constant 9.99999974E-6 : f32
      %32 = vector.broadcast %cst_16 : f32 to vector<1x32xf32>
      %33 = arith.addf %31, %32 : vector<1x32xf32>
      %34 = math.rsqrt %33 : vector<1x32xf32>
      %35 = arith.mulf %28, %34 : vector<1x32xf32>
      %36 = vector.broadcast %19 : vector<1x1xf32> to vector<16x1xf32>
      %37 = arith.subf %16, %36 : vector<16x1xf32>
      %38 = vector.broadcast %37 : vector<16x1xf32> to vector<16x32xf32>
      %39 = vector.broadcast %35 : vector<1x32xf32> to vector<16x32xf32>
      %40 = arith.mulf %38, %39 : vector<16x32xf32>
      %41 = vector.broadcast %27 : vector<1x32xf32> to vector<16x32xf32>
      %42 = arith.addf %40, %41 : vector<16x32xf32>
      %cst_17 = arith.constant 0.000000e+00 : f32
      %43 = vector.broadcast %cst_17 : f32 to vector<16x32xf32>
      %44 = arith.maximumf %42, %43 : vector<16x32xf32>
      %c0_18 = arith.constant 0 : index
      %c0_19 = arith.constant 0 : index
      %45 = vector.load %arg4[%c0_18, %c0_19] : memref<32x32xf32, #tpu.memory_space<vmem>>, vector<32x32xf32>
      %cst_20 = arith.constant dense<0.000000e+00> : vector<16x32xf32>
      %46 = tpu.matmul %44, %45, %cst_20 {dimension_numbers = #tpu.dot_dimension_numbers<[1], [0], [0], [1], [0, 0, 1, 1], [], []>} : vector<16x32xf32>, vector<32x32xf32>, vector<16x32xf32> -> vector<16x32xf32>
      %c0_21 = arith.constant 0 : index
      %c0_22 = arith.constant 0 : index
      %47 = vector.load %arg10[%c0_21, %c0_22] : memref<1x32xf32, #tpu.memory_space<vmem>>, vector<1x32xf32>
      %cst_23 = arith.constant dense<0.000000e+00> : vector<32xf32>
      %48 = vector.multi_reduction <add>, %46, %cst_23 [0] : vector<16x32xf32> to vector<32xf32>
      %49 = vector.shape_cast %48 : vector<32xf32> to vector<1x32xf32>
      %50 = arith.addf %47, %49 : vector<1x32xf32>
      %c0_24 = arith.constant 0 : index
      %c0_25 = arith.constant 0 : index
      %51 = vector.load %arg10[%c0_24, %c0_25] : memref<1x32xf32, #tpu.memory_space<vmem>>, vector<1x32xf32>
      tpu.vector_store %arg10[%c0_24, %c0_25], %50 {strides = array<i32>} : memref<1x32xf32, #tpu.memory_space<vmem>>, vector<1x32xf32>,
      %c0_26 = arith.constant 0 : index
      %c0_27 = arith.constant 0 : index
      %52 = vector.load %arg11[%c0_26, %c0_27] : memref<1x32xf32, #tpu.memory_space<vmem>>, vector<1x32xf32>
      %53 = arith.mulf %46, %46 : vector<16x32xf32>
      %cst_28 = arith.constant dense<0.000000e+00> : vector<32xf32>
      %54 = vector.multi_reduction <add>, %53, %cst_28 [0] : vector<16x32xf32> to vector<32xf32>
      %55 = vector.shape_cast %54 : vector<32xf32> to vector<1x32xf32>
      %56 = arith.addf %52, %55 : vector<1x32xf32>
      %c0_29 = arith.constant 0 : index
      %c0_30 = arith.constant 0 : index
      %57 = vector.load %arg11[%c0_29, %c0_30] : memref<1x32xf32, #tpu.memory_space<vmem>>, vector<1x32xf32>
      tpu.vector_store %arg11[%c0_29, %c0_30], %56 {strides = array<i32>} : memref<1x32xf32, #tpu.memory_space<vmem>>, vector<1x32xf32>,
    } else {
    }
    %c2_i32 = arith.constant 2 : i32
    %11 = arith.cmpi eq, %arg0, %c2_i32 : i32
    %12 = arith.extui %11 : i1 to i32
    %c0_i32_5 = arith.constant 0 : i32
    %13 = arith.cmpi ne, %12, %c0_i32_5 : i32
    scf.if %13 {
      %14 = arith.index_cast %arg1 : i32 to index
      %c0 = arith.constant 0 : index
      %c0_6 = arith.constant 0 : index
      %15 = vector.load %arg7[%14, %c0, %c0_6] : memref<2x16x1xf32, #tpu.memory_space<vmem>>, vector<1x16x1xf32>
      %16 = vector.shape_cast %15 : vector<1x16x1xf32> to vector<16x1xf32>
      %c0_7 = arith.constant 0 : index
      %c0_8 = arith.constant 0 : index
      %17 = vector.load %arg8[%c0_7, %c0_8] : memref<1x1xf32, #tpu.memory_space<vmem>>, vector<1x1xf32>
      %cst = arith.constant 3.125000e-02 : f32
      %18 = vector.broadcast %cst : f32 to vector<1x1xf32>
      %19 = arith.mulf %17, %18 : vector<1x1xf32>
      %c0_9 = arith.constant 0 : index
      %c0_10 = arith.constant 0 : index
      %20 = vector.load %arg9[%c0_9, %c0_10] : memref<1x1xf32, #tpu.memory_space<vmem>>, vector<1x1xf32>
      %cst_11 = arith.constant 3.125000e-02 : f32
      %21 = vector.broadcast %cst_11 : f32 to vector<1x1xf32>
      %22 = arith.mulf %20, %21 : vector<1x1xf32>
      %23 = arith.mulf %19, %19 : vector<1x1xf32>
      %24 = arith.subf %22, %23 : vector<1x1xf32>
      %c0_12 = arith.constant 0 : index
      %c0_13 = arith.constant 0 : index
      %25 = vector.load %arg5[%c0_12, %c0_13] : memref<8x32xf32, #tpu.memory_space<vmem>>, vector<1x32xf32>
      %c1 = arith.constant 1 : index
      %c0_14 = arith.constant 0 : index
      %26 = vector.load %arg5[%c1, %c0_14] : memref<8x32xf32, #tpu.memory_space<vmem>>, vector<1x32xf32>
      %c2 = arith.constant 2 : index
      %c0_15 = arith.constant 0 : index
      %27 = vector.load %arg5[%c2, %c0_15] : memref<8x32xf32, #tpu.memory_space<vmem>>, vector<1x32xf32>
      %28 = arith.mulf %25, %26 : vector<1x32xf32>
      %29 = arith.mulf %25, %25 : vector<1x32xf32>
      %30 = vector.broadcast %24 : vector<1x1xf32> to vector<1x32xf32>
      %31 = arith.mulf %29, %30 : vector<1x32xf32>
      %cst_16 = arith.constant 9.99999974E-6 : f32
      %32 = vector.broadcast %cst_16 : f32 to vector<1x32xf32>
      %33 = arith.addf %31, %32 : vector<1x32xf32>
      %34 = math.rsqrt %33 : vector<1x32xf32>
      %35 = arith.mulf %28, %34 : vector<1x32xf32>
      %36 = vector.broadcast %19 : vector<1x1xf32> to vector<16x1xf32>
      %37 = arith.subf %16, %36 : vector<16x1xf32>
      %38 = vector.broadcast %37 : vector<16x1xf32> to vector<16x32xf32>
      %39 = vector.broadcast %35 : vector<1x32xf32> to vector<16x32xf32>
      %40 = arith.mulf %38, %39 : vector<16x32xf32>
      %41 = vector.broadcast %27 : vector<1x32xf32> to vector<16x32xf32>
      %42 = arith.addf %40, %41 : vector<16x32xf32>
      %cst_17 = arith.constant 0.000000e+00 : f32
      %43 = vector.broadcast %cst_17 : f32 to vector<16x32xf32>
      %44 = arith.maximumf %42, %43 : vector<16x32xf32>
      %c0_18 = arith.constant 0 : index
      %c0_19 = arith.constant 0 : index
      %45 = vector.load %arg4[%c0_18, %c0_19] : memref<32x32xf32, #tpu.memory_space<vmem>>, vector<32x32xf32>
      %cst_20 = arith.constant dense<0.000000e+00> : vector<16x32xf32>
      %46 = tpu.matmul %44, %45, %cst_20 {dimension_numbers = #tpu.dot_dimension_numbers<[1], [0], [0], [1], [0, 0, 1, 1], [], []>} : vector<16x32xf32>, vector<32x32xf32>, vector<16x32xf32> -> vector<16x32xf32>
      %c3 = arith.constant 3 : index
      %c0_21 = arith.constant 0 : index
      %47 = vector.load %arg5[%c3, %c0_21] : memref<8x32xf32, #tpu.memory_space<vmem>>, vector<1x32xf32>
      %c4 = arith.constant 4 : index
      %c0_22 = arith.constant 0 : index
      %48 = vector.load %arg5[%c4, %c0_22] : memref<8x32xf32, #tpu.memory_space<vmem>>, vector<1x32xf32>
      %c5 = arith.constant 5 : index
      %c0_23 = arith.constant 0 : index
      %49 = vector.load %arg5[%c5, %c0_23] : memref<8x32xf32, #tpu.memory_space<vmem>>, vector<1x32xf32>
      %c6 = arith.constant 6 : index
      %c0_24 = arith.constant 0 : index
      %50 = vector.load %arg5[%c6, %c0_24] : memref<8x32xf32, #tpu.memory_space<vmem>>, vector<1x1xf32>
      %c0_25 = arith.constant 0 : index
      %c0_26 = arith.constant 0 : index
      %51 = vector.load %arg10[%c0_25, %c0_26] : memref<1x32xf32, #tpu.memory_space<vmem>>, vector<1x32xf32>
      %cst_27 = arith.constant 3.125000e-02 : f32
      %52 = vector.broadcast %cst_27 : f32 to vector<1x32xf32>
      %53 = arith.mulf %51, %52 : vector<1x32xf32>
      %c0_28 = arith.constant 0 : index
      %c0_29 = arith.constant 0 : index
      %54 = vector.load %arg11[%c0_28, %c0_29] : memref<1x32xf32, #tpu.memory_space<vmem>>, vector<1x32xf32>
      %cst_30 = arith.constant 3.125000e-02 : f32
      %55 = vector.broadcast %cst_30 : f32 to vector<1x32xf32>
      %56 = arith.mulf %54, %55 : vector<1x32xf32>
      %57 = arith.mulf %53, %53 : vector<1x32xf32>
      %58 = arith.subf %56, %57 : vector<1x32xf32>
      %cst_31 = arith.constant 9.99999974E-6 : f32
      %59 = vector.broadcast %cst_31 : f32 to vector<1x32xf32>
      %60 = arith.addf %58, %59 : vector<1x32xf32>
      %61 = math.rsqrt %60 : vector<1x32xf32>
      %62 = arith.mulf %47, %61 : vector<1x32xf32>
      %63 = arith.mulf %53, %62 : vector<1x32xf32>
      %64 = arith.subf %48, %63 : vector<1x32xf32>
      %65 = vector.broadcast %62 : vector<1x32xf32> to vector<16x32xf32>
      %66 = arith.mulf %46, %65 : vector<16x32xf32>
      %67 = vector.broadcast %64 : vector<1x32xf32> to vector<16x32xf32>
      %68 = arith.addf %66, %67 : vector<16x32xf32>
      %cst_32 = arith.constant 0.000000e+00 : f32
      %69 = vector.broadcast %cst_32 : f32 to vector<16x32xf32>
      %70 = arith.maximumf %68, %69 : vector<16x32xf32>
      %71 = vector.broadcast %49 : vector<1x32xf32> to vector<16x32xf32>
      %72 = arith.mulf %70, %71 : vector<16x32xf32>
      %cst_33 = arith.constant dense<0.000000e+00> : vector<16xf32>
      %73 = vector.multi_reduction <add>, %72, %cst_33 [1] : vector<16x32xf32> to vector<16xf32>
      %74 = vector.shape_cast %73 : vector<16xf32> to vector<16x1xf32>
      %75 = vector.broadcast %50 : vector<1x1xf32> to vector<16x1xf32>
      %76 = arith.addf %74, %75 : vector<16x1xf32>
      %c0_34 = arith.constant 0 : index
      %c0_35 = arith.constant 0 : index
      %77 = vector.load %arg6[%c0_34, %c0_35] : memref<16x1xf32, #tpu.memory_space<vmem>>, vector<16x1xf32>
      tpu.vector_store %arg6[%c0_34, %c0_35], %76 {strides = array<i32>} : memref<16x1xf32, #tpu.memory_space<vmem>>, vector<16x1xf32>,
    } else {
    }
    return
  }
  func.func @transform_0(%arg0: i32, %arg1: i32) -> (i32, i32) {
    %c0_i32 = arith.constant 0 : i32
    %0 = arith.cmpi eq, %arg0, %c0_i32 : i32
    %c0_i32_0 = arith.constant 0 : i32
    %1 = arith.select %0, %arg1, %c0_i32_0 : i32
    %c0_i32_1 = arith.constant 0 : i32
    %c0_i32_2 = arith.constant 0 : i32
    return %1, %c0_i32_1 : i32, i32
  }
  func.func @transform_1(%arg0: i32, %arg1: i32) -> (i32, i32) {
    %c0_i32 = arith.constant 0 : i32
    %c0_i32_0 = arith.constant 0 : i32
    %c0_i32_1 = arith.constant 0 : i32
    return %c0_i32, %c0_i32_0 : i32, i32
  }
  func.func @transform_2(%arg0: i32, %arg1: i32) -> (i32, i32) {
    %c0_i32 = arith.constant 0 : i32
    %c0_i32_0 = arith.constant 0 : i32
    %c0_i32_1 = arith.constant 0 : i32
    return %c0_i32, %c0_i32_0 : i32, i32
  }
  func.func @transform_3(%arg0: i32, %arg1: i32) -> (i32, i32) {
    %c0_i32 = arith.constant 0 : i32
    %c0_i32_0 = arith.constant 0 : i32
    %c0_i32_1 = arith.constant 0 : i32
    return %c0_i32, %c0_i32_0 : i32, i32
  }
  func.func @transform_4(%arg0: i32, %arg1: i32) -> (i32, i32) {
    %c2_i32 = arith.constant 2 : i32
    %0 = arith.cmpi eq, %arg0, %c2_i32 : i32
    %c0_i32 = arith.constant 0 : i32
    %1 = arith.select %0, %arg1, %c0_i32 : i32
    %c0_i32_0 = arith.constant 0 : i32
    %c0_i32_1 = arith.constant 0 : i32
    return %1, %c0_i32_0 : i32, i32
  }
}

</mosaic_0001>

<llo_original>
// kernel: tpu_custom_call.1
$region0: #{tpu_custom_call.1}
  #allocation0 [shape = 'u32[]', space=smem, size = 0x4, offset = 0x4, fixed_abs, tag = 'smem constant byte address 0x4 - core index']
  #allocation1 [shape = 'u32[144,128]{1,0:T(1,128)}', space=vmem, size = 0x12000, scoped, tag = 'internal scratch']
  #allocation2 [shape = 'f32[2,16,1]{2,1,0:T(8,128)}', space=vmem, size = 0x4000, scoped, tag = 'scratch operand']
  #allocation3 [shape = 'f32[1,1]{1,0:T(1,128)}', space=vmem, size = 0x200, scoped, tag = 'scratch operand']
  #allocation4 [shape = 'f32[1,1]{1,0:T(1,128)}', space=vmem, size = 0x200, scoped, tag = 'scratch operand']
  #allocation5 [shape = 'f32[1,32]{1,0:T(1,128)}', space=vmem, size = 0x200, scoped, tag = 'scratch operand']
  #allocation6 [shape = 'f32[1,32]{1,0:T(1,128)}', space=vmem, size = 0x200, scoped, tag = 'scratch operand']
  %s0 = inlined_call_operand.hbm [shape: f32[32,64], index: 0, kind: input, shape index: {}]
  %s1 = inlined_call_operand.hbm [shape: f32[1,64], index: 1, kind: input, shape index: {}]
  %s2 = inlined_call_operand.hbm [shape: f32[32,32], index: 2, kind: input, shape index: {}]
  %s3 = inlined_call_operand.hbm [shape: f32[8,32], index: 3, kind: input, shape index: {}]
  %s4 = inlined_call_operand.hbm [shape: f32[32,1], index: 4, kind: output, shape index: {}]
  %s5 = sld [smem:[#allocation0]]
  $region81: #{tpu_custom_call.1} parent=0
    _
  %s7 = ssub.s32 1, %s5
  %s8 = scalar_select 0, %s7, %s5
  $region1: #{tpu_custom_call.1} parent=0
    #allocation7 [shape = 'u8[16384]{0}', space=vmem, size = 0x4000, scoped, tag = 'input window, operand 0']
    #allocation8 [shape = 's32[2]{0}', space=sflag, size = 0x8, scoped, tag = 'scoped memory for tpu_custom_call.1']
    #allocation9 [shape = 's32[2]{0}', space=sflag, size = 0x8, scoped, tag = 'scoped memory for tpu_custom_call.1']
    #allocation10 [shape = 'u8[512]{0}', space=vmem, size = 0x400, scoped, tag = 'input window, operand 1, single buffered']
    #allocation11 [shape = 's32[1]{0}', space=sflag, size = 0x4, scoped, tag = 'scoped memory for tpu_custom_call.1']
    #allocation12 [shape = 'u8[16384]{0}', space=vmem, size = 0x4000, scoped, tag = 'input window, operand 2, single buffered']
    #allocation13 [shape = 'u8[4096]{0}', space=vmem, size = 0x1000, scoped, tag = 'input window, operand 3, single buffered']
    #allocation14 [shape = 's32[1]{0}', space=sflag, size = 0x4, scoped, tag = 'scoped memory for tpu_custom_call.1']
    #allocation15 [shape = 'u8[16384]{0}', space=vmem, size = 0x4000, scoped, tag = 'output window, operand 0']
    %9 = vsyncpa [#allocation8], 0
    %s10 = scalar_lea.sflag [#allocation8], 1
    %11 = vsyncpa %s10, 0
    %12 = vsyncpa [#allocation11], 0
    %13 = vsyncpa [#allocation14], 0
    %14 = vsyncpa [#allocation9], 0
    %s15 = scalar_lea.sflag [#allocation9], 1
    %16 = vsyncpa %s15, 0
    loop: start=0, step=1, limit=8
    $region2: #{tpu_custom_call.1} parent=1 // loop_pre_header
      _
    $region3: #{tpu_custom_call.1} parent=1 // loop_header
      %s18 = sphi 0, %s22
      %p19 = scmp.ge.s32.totalorder %s18, 8
      %s25 = sphi 0, %s37
      %s26 = sphi 0, %s33
      %s27 = sphi 0, %s25
      %s28 = sphi 0, %s26
      %s29 = sphi 0, %s27
      %s30 = sphi 0, %s28
      %s44 = sphi 0, %s46
      %s47 = sphi 0, %s44
      %s48 = sphi 0, %s47
      %s64 = sphi 0, %s48
      %s68 = sphi 0, %s68
      %s70 = sphi 0, %s68
      %s71 = sphi 0, %s70
      %s85 = sphi 0, %s71
      %s89 = sphi 0, %s89
      %s91 = sphi 0, %s89
      %s92 = sphi 0, %s91
      %s106 = sphi 0, %s92
      %s110 = sphi 0, %s110
      %s112 = sphi 0, %s110
      %s113 = sphi 0, %s112
      %s127 = sphi 0, %s113
      %s137 = sphi 0, %s139
      %s140 = sphi 0, %s137
      %s141 = sphi 0, %s140
      %s157 = sphi 0, %s141
    $region4: #{tpu_custom_call.1} parent=1 // loop_header_branch
      %21 = sbr.rel (%p19) target = $region8
    $region5: #{tpu_custom_call.1} parent=1 // loop_body
      %s23 = ssub.s32 %s18, 1
      %s24 = ssub.s32 %s18, 2
      %s31 = sadd.s32 1, %s26
      %p32 = scmp.ge.s32.totalorder %s31, 2
      %s33 = scalar_select %p32, 0, %s31
      %s34 = sadd.s32 1, %s25
      %s35 = scalar_select %p32, %s34, %s25
      %p36 = scmp.ge.s32.totalorder %s35, 3
      %s37 = scalar_select %p36, 0, %s35
      %p38 = scmp.eq.s32.totalorder %s25, 0
      %s39 = scalar_select %p38, %s26, 0
      %p40 = scmp.eq.s32.totalorder %s37, 0
      %s41 = scalar_select %p40, %s33, 0
      %s42 = ssub.s32 %s39, %s41
      %p43 = scmp.eq.s32.totalorder %s42, 0
      %s45 = sadd.s32 %s44, 1
      %s46 = scalar_select %p43, %s44, %s45
      %p49 = pneg %p43
      %p50 = scmp.eq.s32.totalorder %s18, 5
      %p51 = por %p49, %p50
      %p52 = scmp.ne.s32.totalorder %s44, %s47
      %p53 = scmp.eq.s32.totalorder %s18, 0
      %p54 = por %p52, %p53
      %p55 = scmp.ne.s32.totalorder %s44, %s47
      %p56 = scmp.eq.s32.totalorder %s23, 5
      %p57 = por %p55, %p56
      %p58 = scmp.ne.s32.totalorder %s47, %s48
      %p59 = scmp.eq.s32.totalorder %s23, 0
      %p60 = por %p58, %p59
      %p61 = scmp.ne.s32.totalorder %s47, %s48
      %p62 = scmp.eq.s32.totalorder %s24, 5
      %p63 = por %p61, %p62
      %p65 = scmp.ne.s32.totalorder %s48, %s64
      %p66 = scmp.eq.s32.totalorder %s24, 0
      %p67 = por %p65, %p66
      %s69 = sadd.s32 %s68, 1
      %p72 = scmp.eq.s32.totalorder %s18, 5
      %p73 = scmp.ne.s32.totalorder %s68, %s70
      %p74 = scmp.eq.s32.totalorder %s18, 0
      %p75 = por %p73, %p74
      %p76 = scmp.ne.s32.totalorder %s68, %s70
      %p77 = scmp.eq.s32.totalorder %s23, 5
      %p78 = por %p76, %p77
      %p79 = scmp.ne.s32.totalorder %s70, %s71
      %p80 = scmp.eq.s32.totalorder %s23, 0
      %p81 = por %p79, %p80
      %p82 = scmp.ne.s32.totalorder %s70, %s71
      %p83 = scmp.eq.s32.totalorder %s24, 5
      %p84 = por %p82, %p83
      %p86 = scmp.ne.s32.totalorder %s71, %s85
      %p87 = scmp.eq.s32.totalorder %s24, 0
      %p88 = por %p86, %p87
      %s90 = sadd.s32 %s89, 1
      %p93 = scmp.eq.s32.totalorder %s18, 5
      %p94 = scmp.ne.s32.totalorder %s89, %s91
      %p95 = scmp.eq.s32.totalorder %s18, 0
      %p96 = por %p94, %p95
      %p97 = scmp.ne.s32.totalorder %s89, %s91
      %p98 = scmp.eq.s32.totalorder %s23, 5
      %p99 = por %p97, %p98
      %p100 = scmp.ne.s32.totalorder %s91, %s92
      %p101 = scmp.eq.s32.totalorder %s23, 0
      %p102 = por %p100, %p101
      %p103 = scmp.ne.s32.totalorder %s91, %s92
      %p104 = scmp.eq.s32.totalorder %s24, 5
      %p105 = por %p103, %p104
      %p107 = scmp.ne.s32.totalorder %s92, %s106
      %p108 = scmp.eq.s32.totalorder %s24, 0
      %p109 = por %p107, %p108
      %s111 = sadd.s32 %s110, 1
      %p114 = scmp.eq.s32.totalorder %s18, 5
      %p115 = scmp.ne.s32.totalorder %s110, %s112
      %p116 = scmp.eq.s32.totalorder %s18, 0
      %p117 = por %p115, %p116
      %p118 = scmp.ne.s32.totalorder %s110, %s112
      %p119 = scmp.eq.s32.totalorder %s23, 5
      %p120 = por %p118, %p119
      %p121 = scmp.ne.s32.totalorder %s112, %s113
      %p122 = scmp.eq.s32.totalorder %s23, 0
      %p123 = por %p121, %p122
      %p124 = scmp.ne.s32.totalorder %s112, %s113
      %p125 = scmp.eq.s32.totalorder %s24, 5
      %p126 = por %p124, %p125
      %p128 = scmp.ne.s32.totalorder %s113, %s127
      %p129 = scmp.eq.s32.totalorder %s24, 0
      %p130 = por %p128, %p129
      %p131 = scmp.eq.s32.totalorder %s25, 2
      %s132 = scalar_select %p131, %s26, 0
      %p133 = scmp.eq.s32.totalorder %s37, 2
      %s134 = scalar_select %p133, %s33, 0
      %s135 = ssub.s32 %s132, %s134
      %p136 = scmp.eq.s32.totalorder %s135, 0
      %s138 = sadd.s32 %s137, 1
      %s139 = scalar_select %p136, %s137, %s138
      %p142 = pneg %p136
      %p143 = scmp.eq.s32.totalorder %s18, 5
      %p144 = por %p142, %p143
      %p145 = scmp.ne.s32.totalorder %s137, %s140
      %p146 = scmp.eq.s32.totalorder %s18, 0
      %p147 = por %p145, %p146
      %p148 = scmp.ne.s32.totalorder %s137, %s140
      %p149 = scmp.eq.s32.totalorder %s23, 5
      %p150 = por %p148, %p149
      %p151 = scmp.ne.s32.totalorder %s140, %s141
      %p152 = scmp.eq.s32.totalorder %s23, 0
      %p153 = por %p151, %p152
      %p154 = scmp.ne.s32.totalorder %s140, %s141
      %p155 = scmp.eq.s32.totalorder %s24, 5
      %p156 = por %p154, %p155
      %p158 = scmp.ne.s32.totalorder %s141, %s157
      %p159 = scmp.eq.s32.totalorder %s24, 0
      %p160 = por %p158, %p159
      %p161 = scmp.le.s32.totalorder 1, %s18
      %p162 = scmp.lt.s32.totalorder %s18, 7
      %p163 = pnand %p161, %p162
      %p164 = pneg %p163
      // Predicated region
      $region9: #{tpu_custom_call.1} parent=5 // pred_check
        _
      $region10: #{tpu_custom_call.1} parent=5 // pred_check_branch
        %166 = sbr.rel (%p163) target = $region12
      $region11: #{tpu_custom_call.1} parent=5 // pred_region
        %s167 = ssub.s32 %s18, 1
        // Predicated region
        $region13: #{tpu_custom_call.1} parent=11 // pred_check
          %p168 = pneg %p81
        $region14: #{tpu_custom_call.1} parent=11 // pred_check_branch
          %170 = sbr.rel (%p168) target = $region16
        $region15: #{tpu_custom_call.1} parent=11 // pred_region
          %s172 = ssub.s32 16, 16
          %173 = vsyncadd [#allocation11], %s172
          %s175 = sshll.u32 [#allocation10], 4
          %s176 = int_to_ptr.vmem [resolvable:$true] %s175
          %178 = dma.hbm_to_vmem [thread:$0]  %s1, 16, %s176, [#allocation11]
        $region16: #{tpu_custom_call.1} parent=11 // pred_fallthru
          _
        // Predicated region
        $region17: #{tpu_custom_call.1} parent=11 // pred_check
          %p179 = pneg %p102
        $region18: #{tpu_custom_call.1} parent=11 // pred_check_branch
          %181 = sbr.rel (%p179) target = $region20
        $region19: #{tpu_custom_call.1} parent=11 // pred_region
          %s183 = ssub.s32 512, 512
          %184 = vsyncadd [#allocation11], %s183
          %s185 = sshll.u32 [#allocation12], 4
          %s186 = int_to_ptr.vmem [resolvable:$true] %s185
          %191 = dma.hbm_to_vmem [thread:$0]  %s2, 512, %s186, [#allocation11], 128, 128, 8
        $region20: #{tpu_custom_call.1} parent=11 // pred_fallthru
          _
        // Predicated region
        $region21: #{tpu_custom_call.1} parent=11 // pred_check
          %p192 = pneg %p123
        $region22: #{tpu_custom_call.1} parent=11 // pred_check_branch
          %194 = sbr.rel (%p192) target = $region24
        $region23: #{tpu_custom_call.1} parent=11 // pred_region
          %s196 = ssub.s32 128, 128
          %197 = vsyncadd [#allocation14], %s196
          %s199 = sshll.u32 [#allocation13], 4
          %s200 = int_to_ptr.vmem [resolvable:$true] %s199
          %202 = dma.hbm_to_vmem [thread:$0]  %s3, 128, %s200, [#allocation14]
        $region24: #{tpu_custom_call.1} parent=11 // pred_fallthru
          _
      $region12: #{tpu_custom_call.1} parent=5 // pred_fallthru
        _
      %p203 = scmp.lt.s32.totalorder %s18, 6
      // Predicated region
      $region25: #{tpu_custom_call.1} parent=5 // pred_check
        %p204 = pneg %p203
      $region26: #{tpu_custom_call.1} parent=5 // pred_check_branch
        %206 = sbr.rel (%p204) target = $region28
      $region27: #{tpu_custom_call.1} parent=5 // pred_region
        // Predicated region
        $region29: #{tpu_custom_call.1} parent=27 // pred_check
          %p207 = pneg %p54
        $region30: #{tpu_custom_call.1} parent=27 // pred_check_branch
          %209 = sbr.rel (%p207) target = $region32
        $region31: #{tpu_custom_call.1} parent=27 // pred_region
          %s210 = sand.u32 %s44, 1
          %s211 = scalar_lea.sflag [#allocation8], %s210
          %s212 = sand.u32 %s44, 1
          %s213 = smul.addr %s212, 16
          %s214 = scalar_lea.vmem [#allocation7], %s213
          %p215 = scmp.eq.s32.totalorder %s25, 0
          %s216 = scalar_select %p215, %s26, 0
          %s217 = smul.u32 2, %s216
          %s219 = ssub.s32 256, 256
          %220 = vsyncadd %s211, %s219
          %s221 = smul.addr %s217, 128
          %s222 = scalar_lea.hbm %s0, %s221
          %s223 = sshll.u32 %s214, 4
          %s224 = int_to_ptr.vmem [resolvable:$true] %s223
          %229 = dma.hbm_to_vmem [thread:$0]  %s222, 256, %s224, %s211, 128, 128, 8
        $region32: #{tpu_custom_call.1} parent=27 // pred_fallthru
          _
      $region28: #{tpu_custom_call.1} parent=5 // pred_fallthru
        _
      %p230 = scmp.le.s32.totalorder 1, %s18
      %p231 = scmp.lt.s32.totalorder %s18, 7
      %p232 = pnand %p230, %p231
      %p233 = pneg %p232
      // Predicated region
      $region33: #{tpu_custom_call.1} parent=5 // pred_check
        _
      $region34: #{tpu_custom_call.1} parent=5 // pred_check_branch
        %235 = sbr.rel (%p232) target = $region36
      $region35: #{tpu_custom_call.1} parent=5 // pred_region
        %s236 = ssub.s32 %s18, 1
        %s237 = sand.u32 %s47, 1
        %s238 = scalar_lea.sflag [#allocation8], %s237
        %s239 = sand.u32 %s47, 1
        %s240 = smul.addr %s239, 16
        %s241 = scalar_lea.vmem [#allocation7], %s240
        // Predicated region
        $region37: #{tpu_custom_call.1} parent=35 // pred_check
          %p242 = pneg %p60
        $region38: #{tpu_custom_call.1} parent=35 // pred_check_branch
          %244 = sbr.rel (%p242) target = $region40
        $region39: #{tpu_custom_call.1} parent=35 // pred_region
          %245 = dma.done %s238, 256
        $region40: #{tpu_custom_call.1} parent=35 // pred_fallthru
          _
        // Predicated region
        $region41: #{tpu_custom_call.1} parent=35 // pred_check
          %p246 = pneg %p81
        $region42: #{tpu_custom_call.1} parent=35 // pred_check_branch
          %248 = sbr.rel (%p246) target = $region44
        $region43: #{tpu_custom_call.1} parent=35 // pred_region
          %249 = dma.done [#allocation11], 16
        $region44: #{tpu_custom_call.1} parent=35 // pred_fallthru
          _
        // Predicated region
        $region45: #{tpu_custom_call.1} parent=35 // pred_check
          %p250 = pneg %p102
        $region46: #{tpu_custom_call.1} parent=35 // pred_check_branch
          %252 = sbr.rel (%p250) target = $region48
        $region47: #{tpu_custom_call.1} parent=35 // pred_region
          %253 = dma.done [#allocation11], 512
        $region48: #{tpu_custom_call.1} parent=35 // pred_fallthru
          _
        // Predicated region
        $region49: #{tpu_custom_call.1} parent=35 // pred_check
          %p254 = pneg %p123
        $region50: #{tpu_custom_call.1} parent=35 // pred_check_branch
          %256 = sbr.rel (%p254) target = $region52
        $region51: #{tpu_custom_call.1} parent=35 // pred_region
          %257 = dma.done [#allocation14], 128
        $region52: #{tpu_custom_call.1} parent=35 // pred_fallthru
          _
        %s258 = sand.u32 %s47, 1
        %s259 = scalar_lea.sflag [#allocation8], %s258
        %s260 = sand.u32 %s47, 1
        %s261 = smul.addr %s260, 16
        %s262 = scalar_lea.vmem [#allocation7], %s261
        %p263 = pneg %p60
        %p264 = pneg %p57
        %p265 = pneg %p81
        %p266 = pneg %p78
        %p267 = pneg %p102
        %p268 = pneg %p99
        %p269 = pneg %p123
        %p270 = pneg %p120
        %p271 = pneg %p153
        %p272 = pneg %p150
        %s273 = sand.u32 %s140, 1
        %s274 = scalar_lea.sflag [#allocation9], %s273
        %s275 = sand.u32 %s140, 1
        %s276 = smul.addr %s275, 16
        %s277 = scalar_lea.vmem [#allocation15], %s276
        %p278 = scmp.eq.s32.totalorder %s27, 0
        %s279 = scalar_select %p278, %s28, 0
        %s280 = smul.u32 2, %s279
        %p281 = scmp.eq.s32.totalorder %s27, 2
        %s282 = scalar_select %p281, %s28, 0
        %s283 = smul.u32 2, %s282
        %p284 = scmp.eq.s32.totalorder %s27, 0
        %p285 = scmp.eq.s32.totalorder %s28, 0
        %p286 = pnand %p284, %p285
        %p287 = pneg %p286
        // Predicated region
        $region53: #{tpu_custom_call.1} parent=35 // pred_check
          _
        $region54: #{tpu_custom_call.1} parent=35 // pred_check_branch
          %289 = sbr.rel (%p286) target = $region56
        $region55: #{tpu_custom_call.1} parent=35 // pred_region
          %vm290 = vcmask 0
          %291 = vst.msk [vmem:[#allocation3] sm:$0x1] %vm290, 0.0
          %292 = vst.msk [vmem:[#allocation4] sm:$0x1] %vm290, 0.0
          %vm293 = vcmask 253952
          %294 = vst.msk [vmem:[#allocation5] sm:$0x1] %vm293, 0.0
          %295 = vst.msk [vmem:[#allocation6] sm:$0x1] %vm293, 0.0
        $region56: #{tpu_custom_call.1} parent=35 // pred_fallthru
          _
        // Predicated region
        $region57: #{tpu_custom_call.1} parent=35 // pred_check
          %p296 = pneg %p284
        $region58: #{tpu_custom_call.1} parent=35 // pred_check_branch
          %298 = sbr.rel (%p296) target = $region60
        $region59: #{tpu_custom_call.1} parent=35 // pred_region
          %v299 = vld [vmem:[%s241] sm:$0xff]
          %v300 = vld [vmem:[%s241 + $0x8] sm:$0xff]
          %v301 = vld [vmem:[#allocation10] sm:$0x1]
          %v303 = vlaneseq
          %v304 = vshrl.u32 %v303, 7
          %v305 = vsub.s32 0, %v304
          %v306 = vrot.slane %v301, %v305
          %v308 = vmul.f32 %v299, %v306
          %v309 = vmul.f32 %v300, %v306
          %vm310 = vcmask 523264
          %v311 = vsel %vm310, %v308, 0.0
          %312 = vadd.xlane.f32.xlu0 %v311
          %v313 = vpop.xlane.xlu0 %312
          %v314 = vsel %vm310, %v309, 0.0
          %315 = vadd.xlane.f32.xlu0 %v314
          %v316 = vpop.xlane.xlu0 %315
          %s317 = smul.u32 %s28, 16
          %s318 = scalar_lea.vmem [#allocation2], %s317
          %vm319 = vcmask 7168
          %320 = vst.msk [vmem:[%s318] sm:$0xff] %vm319, %v313
          %321 = vst.msk [vmem:[%s318 + $0x8] sm:$0xff] %vm319, %v316
          %v322 = vld [vmem:[#allocation3] sm:$0x1]
          %v323 = vadd.f32 %v313, %v316
          %v324 = vrot.slane %v323, 4
          %v325 = vadd.f32 %v323, %v324
          %v326 = vrot.slane %v325, 2
          %v327 = vadd.f32 %v325, %v326
          %v328 = vrot.slane %v327, 1
          %v329 = vadd.f32 %v327, %v328
          %v330 = vadd.f32 %v322, %v329
          %vm331 = vcmask 0
          %332 = vst.msk [vmem:[#allocation3] sm:$0x1] %vm331, %v330
          %v333 = vld [vmem:[#allocation4] sm:$0x1]
          %v334 = vmul.f32 %v313, %v313
          %v335 = vmul.f32 %v316, %v316
          %v336 = vadd.f32 %v334, %v335
          %v337 = vrot.slane %v336, 4
          %v338 = vadd.f32 %v336, %v337
          %v339 = vrot.slane %v338, 2
          %v340 = vadd.f32 %v338, %v339
          %v341 = vrot.slane %v340, 1
          %v342 = vadd.f32 %v340, %v341
          %v343 = vadd.f32 %v333, %v342
          %344 = vst.msk [vmem:[#allocation4] sm:$0x1] %vm331, %v343
        $region60: #{tpu_custom_call.1} parent=35 // pred_fallthru
          _
        %p345 = scmp.eq.s32.totalorder %s27, 1
        // Predicated region
        $region61: #{tpu_custom_call.1} parent=35 // pred_check
          %p346 = pneg %p345
        $region62: #{tpu_custom_call.1} parent=35 // pred_check_branch
          %348 = sbr.rel (%p346) target = $region64
        $region63: #{tpu_custom_call.1} parent=35 // pred_region
          %s349 = smul.u32 %s28, 16
          %s350 = scalar_lea.vmem [#allocation2], %s349
          %v351 = vld [vmem:[%s350] sm:$0xff]
          %v352 = vld [vmem:[%s350 + $0x8] sm:$0xff]
          %v353 = vld [vmem:[#allocation3] sm:$0x1]
          %v354 = vmul.f32 %v353, 0.03125
          %v355 = vld [vmem:[#allocation4] sm:$0x1]
          %v356 = vmul.f32 %v355, 0.03125
          %v357 = vmul.f32 %v354, %v354
          %v358 = vsub.f32 %v356, %v357
          %v359 = vld [vmem:[#allocation13] sm:$0x1]
          %v360 = vld [vmem:[#allocation13 + $0x1] sm:$0x1]
          %v361 = vld [vmem:[#allocation13 + $0x2] sm:$0x1]
          %v362 = vmul.f32 %v359, %v360
          %v363 = vmul.f32 %v359, %v359
          %365 = vset.pattern.permute.xlu0 0
          %366 = vperm.xlu0 %365, %v358
          %v367 = vpop.permute.xlu0 %366
          %v369 = vlaneseq
          %v370 = vshrl.u32 %v369, 7
          %v371 = vsub.s32 0, %v370
          %v372 = vrot.slane %v367, %v371
          %v373 = vmul.f32 %v363, %v372
          %v374 = vadd.f32 %v373, 1e-05
          %v375 = vrsqrt.pop %v374
          %v376 = vmul.f32 %v362, %v375
          %v378 = vlaneseq
          %v379 = vshrl.u32 %v378, 7
          %v380 = vsub.s32 0, %v379
          %v381 = vrot.slane %v354, %v380
          %v383 = vsub.f32 %v351, %v381
          %v384 = vsub.f32 %v352, %v381
          %386 = vset.pattern.permute.xlu0 0
          %387 = vperm.xlu0 %386, %v383
          %v388 = vpop.permute.xlu0 %387
          %391 = vset.pattern.permute.xlu0 0
          %392 = vperm.xlu0 %391, %v384
          %v393 = vpop.permute.xlu0 %392
          %v395 = vlaneseq
          %v396 = vshrl.u32 %v395, 7
          %v397 = vsub.s32 0, %v396
          %v398 = vrot.slane %v376, %v397
          %v399 = vmul.f32 %v388, %v398
          %v400 = vmul.f32 %v393, %v398
          %v401 = vlaneseq
          %v402 = vshrl.u32 %v401, 7
          %v403 = vsub.s32 0, %v402
          %v404 = vrot.slane %v361, %v403
          %v405 = vadd.f32 %v399, %v404
          %v406 = vadd.f32 %v400, %v404
          %v407 = vmax.f32 %v405, 0.0
          %v408 = vmax.f32 %v406, 0.0
          %v409 = vld [vmem:[#allocation12] sm:$0xff]
          %v410 = vld [vmem:[#allocation12 + $0x8] sm:$0xff]
          %v411 = vld [vmem:[#allocation12 + $0x10] sm:$0xff]
          %v412 = vld [vmem:[#allocation12 + $0x18] sm:$0xff]
          %vm413 = vcmask 261120
          %v415 = vsel %vm413, %v407, 0
          %v418 = vsel %vm413, %v408, 0
          %420 = vmatprep.subr.mxu0 0.0
          %421 = vmatpush1.msra.mxu0 %v409
          %422 = vmatprep.subr.mxu0 0.0
          %423 = vmatpush1.msra.mxu0 %v410
          %424 = vmatprep.subr.mxu0 0.0
          %425 = vmatpush1.msra.mxu0 %v411
          %426 = vmatprep.subr.mxu0 0.0
          %427 = vmatpush1.msra.mxu0 %v412
          %428 = vmatprep.subr.mxu0 0.0
          %429 = vmatpush1.msra.mxu0 0.0
          %430 = vmatprep.subr.mxu0 0.0
          %431 = vmatpush1.msra.mxu0 0.0
          %432 = vmatprep.subr.mxu0 0.0
          %433 = vmatpush1.msra.mxu0 0.0
          %434 = vmatprep.subr.mxu0 0.0
          %435 = vmatpush1.msra.mxu0 0.0
          %436 = vmatprep.subr.mxu0 0.0
          %437 = vmatpush1.msra.mxu0 0.0
          %438 = vmatprep.subr.mxu0 0.0
          %439 = vmatpush1.msra.mxu0 0.0
          %440 = vmatprep.subr.mxu0 0.0
          %441 = vmatpush1.msra.mxu0 0.0
          %442 = vmatprep.subr.mxu0 0.0
          %443 = vmatpush1.msra.mxu0 0.0
          %444 = vmatprep.subr.mxu0 0.0
          %445 = vmatpush1.msra.mxu0 0.0
          %446 = vmatprep.subr.mxu0 0.0
          %447 = vmatpush1.msra.mxu0 0.0
          %448 = vmatprep.subr.mxu0 0.0
          %449 = vmatpush1.msra.mxu0 0.0
          %450 = vmatprep.subr.mxu0 0.0
          %451 = vmatpush1.msra.mxu0 0.0
          %452 = vmatprep.subr.mxu0 0.0
          %453 = vmatpush1.msra.mxu0 0.0
          %454 = vmatprep.subr.mxu0 0.0
          %455 = vmatpush1.msra.mxu0 0.0
          %456 = vmatprep.subr.mxu0 0.0
          %457 = vmatpush1.msra.mxu0 0.0
          %458 = vmatprep.subr.mxu0 0.0
          %459 = vmatpush1.msra.mxu0 0.0
          %460 = vmatprep.subr.mxu0 0.0
          %461 = vmatpush1.msra.mxu0 0.0
          %462 = vmatprep.subr.mxu0 0.0
          %463 = vmatpush1.msra.mxu0 0.0
          %464 = vmatprep.subr.mxu0 0.0
          %465 = vmatpush1.msra.mxu0 0.0
          %466 = vmatprep.subr.mxu0 0.0
          %467 = vmatpush1.msra.mxu0 0.0
          %468 = vmatprep.subr.mxu0 0.0
          %469 = vmatpush1.msra.mxu0 0.0
          %470 = vmatprep.subr.mxu0 0.0
          %471 = vmatpush1.msra.mxu0 0.0
          %472 = vmatprep.subr.mxu0 0.0
          %473 = vmatpush1.msra.mxu0 0.0
          %474 = vmatprep.subr.mxu0 0.0
          %475 = vmatpush1.msra.mxu0 0.0
          %476 = vmatprep.subr.mxu0 0.0
          %477 = vmatpush1.msra.mxu0 0.0
          %478 = vmatprep.subr.mxu0 0.0
          %479 = vmatpush1.msra.mxu0 0.0
          %480 = vmatprep.subr.mxu0 0.0
          %481 = vmatpush1.msra.mxu0 0.0
          %482 = vmatprep.subr.mxu0 0.0
          %483 = vmatpush1.msra.mxu0 0.0
          %484 = vmatprep.mubr.f32.mxu0 0.0
          %485 = vmatmul.mubr.f32.gmra.mrb[0].mxu0 %v415
          %v486 = vpop.f32.mrb[0].mxu0
          %v487 = vadd.f32 0.0, %v486
          %v488 = vpop.f32.mrb[0].mxu0
          %489 = vmatprep.mubr.f32.mxu0 0.0
          %490 = vmatmul.mubr.f32.gmra.mrb[0].mxu0 %v418
          %v491 = vpop.f32.mrb[0].mxu0
          %v492 = vadd.f32 0.0, %v491
          %v493 = vpop.f32.mrb[0].mxu0
          %494 = vdwg.mxu0
          %v495 = vld [vmem:[#allocation5] sm:$0x1]
          %v496 = vsel %vm413, %v487, 0.0
          %v497 = vsel %vm413, %v492, 0.0
          %v498 = vadd.f32 %v496, %v497
          %v499 = vrot.slane %v498, 4
          %v500 = vadd.f32 %v498, %v499
          %v501 = vrot.slane %v500, 2
          %v502 = vadd.f32 %v500, %v501
          %v503 = vrot.slane %v502, 1
          %v504 = vadd.f32 %v502, %v503
          %v505 = vadd.f32 %v495, %v504
          %vm506 = vcmask 253952
          %507 = vst.msk [vmem:[#allocation5] sm:$0x1] %vm506, %v505
          %v508 = vld [vmem:[#allocation6] sm:$0x1]
          %v509 = vmul.f32 %v487, %v487
          %v510 = vmul.f32 %v492, %v492
          %v511 = vsel %vm413, %v509, 0.0
          %v512 = vsel %vm413, %v510, 0.0
          %v513 = vadd.f32 %v511, %v512
          %v514 = vrot.slane %v513, 4
          %v515 = vadd.f32 %v513, %v514
          %v516 = vrot.slane %v515, 2
          %v517 = vadd.f32 %v515, %v516
          %v518 = vrot.slane %v517, 1
          %v519 = vadd.f32 %v517, %v518
          %v520 = vadd.f32 %v508, %v519
          %521 = vst.msk [vmem:[#allocation6] sm:$0x1] %vm506, %v520
        $region64: #{tpu_custom_call.1} parent=35 // pred_fallthru
          _
        %p522 = scmp.eq.s32.totalorder %s27, 2
        // Predicated region
        $region65: #{tpu_custom_call.1} parent=35 // pred_check
          %p523 = pneg %p522
        $region66: #{tpu_custom_call.1} parent=35 // pred_check_branch
          %525 = sbr.rel (%p523) target = $region68
        $region67: #{tpu_custom_call.1} parent=35 // pred_region
          %s526 = smul.u32 %s28, 16
          %s527 = scalar_lea.vmem [#allocation2], %s526
          %v528 = vld [vmem:[%s527] sm:$0xff]
          %v529 = vld [vmem:[%s527 + $0x8] sm:$0xff]
          %v530 = vld [vmem:[#allocation3] sm:$0x1]
          %v531 = vmul.f32 %v530, 0.03125
          %v532 = vld [vmem:[#allocation4] sm:$0x1]
          %v533 = vmul.f32 %v532, 0.03125
          %v534 = vmul.f32 %v531, %v531
          %v535 = vsub.f32 %v533, %v534
          %v536 = vld [vmem:[#allocation13] sm:$0x1]
          %v537 = vld [vmem:[#allocation13 + $0x1] sm:$0x1]
          %v538 = vld [vmem:[#allocation13 + $0x2] sm:$0x1]
          %v539 = vmul.f32 %v536, %v537
          %v540 = vmul.f32 %v536, %v536
          %542 = vset.pattern.permute.xlu0 0
          %543 = vperm.xlu0 %542, %v535
          %v544 = vpop.permute.xlu0 %543
          %v546 = vlaneseq
          %v547 = vshrl.u32 %v546, 7
          %v548 = vsub.s32 0, %v547
          %v549 = vrot.slane %v544, %v548
          %v550 = vmul.f32 %v540, %v549
          %v551 = vadd.f32 %v550, 1e-05
          %v552 = vrsqrt.pop %v551
          %v553 = vmul.f32 %v539, %v552
          %v555 = vlaneseq
          %v556 = vshrl.u32 %v555, 7
          %v557 = vsub.s32 0, %v556
          %v558 = vrot.slane %v531, %v557
          %v560 = vsub.f32 %v528, %v558
          %v561 = vsub.f32 %v529, %v558
          %563 = vset.pattern.permute.xlu0 0
          %564 = vperm.xlu0 %563, %v560
          %v565 = vpop.permute.xlu0 %564
          %568 = vset.pattern.permute.xlu0 0
          %569 = vperm.xlu0 %568, %v561
          %v570 = vpop.permute.xlu0 %569
          %v572 = vlaneseq
          %v573 = vshrl.u32 %v572, 7
          %v574 = vsub.s32 0, %v573
          %v575 = vrot.slane %v553, %v574
          %v576 = vmul.f32 %v565, %v575
          %v577 = vmul.f32 %v570, %v575
          %v578 = vlaneseq
          %v579 = vshrl.u32 %v578, 7
          %v580 = vsub.s32 0, %v579
          %v581 = vrot.slane %v538, %v580
          %v582 = vadd.f32 %v576, %v581
          %v583 = vadd.f32 %v577, %v581
          %v584 = vmax.f32 %v582, 0.0
          %v585 = vmax.f32 %v583, 0.0
          %v586 = vld [vmem:[#allocation12] sm:$0xff]
          %v587 = vld [vmem:[#allocation12 + $0x8] sm:$0xff]
          %v588 = vld [vmem:[#allocation12 + $0x10] sm:$0xff]
          %v589 = vld [vmem:[#allocation12 + $0x18] sm:$0xff]
          %vm590 = vcmask 261120
          %v592 = vsel %vm590, %v584, 0
          %v595 = vsel %vm590, %v585, 0
          %597 = vmatprep.subr.mxu0 0.0
          %598 = vmatpush1.msra.mxu0 %v586
          %599 = vmatprep.subr.mxu0 0.0
          %600 = vmatpush1.msra.mxu0 %v587
          %601 = vmatprep.subr.mxu0 0.0
          %602 = vmatpush1.msra.mxu0 %v588
          %603 = vmatprep.subr.mxu0 0.0
          %604 = vmatpush1.msra.mxu0 %v589
          %605 = vmatprep.subr.mxu0 0.0
          %606 = vmatpush1.msra.mxu0 0.0
          %607 = vmatprep.subr.mxu0 0.0
          %608 = vmatpush1.msra.mxu0 0.0
          %609 = vmatprep.subr.mxu0 0.0
          %610 = vmatpush1.msra.mxu0 0.0
          %611 = vmatprep.subr.mxu0 0.0
          %612 = vmatpush1.msra.mxu0 0.0
          %613 = vmatprep.subr.mxu0 0.0
          %614 = vmatpush1.msra.mxu0 0.0
          %615 = vmatprep.subr.mxu0 0.0
          %616 = vmatpush1.msra.mxu0 0.0
          %617 = vmatprep.subr.mxu0 0.0
          %618 = vmatpush1.msra.mxu0 0.0
          %619 = vmatprep.subr.mxu0 0.0
          %620 = vmatpush1.msra.mxu0 0.0
          %621 = vmatprep.subr.mxu0 0.0
          %622 = vmatpush1.msra.mxu0 0.0
          %623 = vmatprep.subr.mxu0 0.0
          %624 = vmatpush1.msra.mxu0 0.0
          %625 = vmatprep.subr.mxu0 0.0
          %626 = vmatpush1.msra.mxu0 0.0
          %627 = vmatprep.subr.mxu0 0.0
          %628 = vmatpush1.msra.mxu0 0.0
          %629 = vmatprep.subr.mxu0 0.0
          %630 = vmatpush1.msra.mxu0 0.0
          %631 = vmatprep.subr.mxu0 0.0
          %632 = vmatpush1.msra.mxu0 0.0
          %633 = vmatprep.subr.mxu0 0.0
          %634 = vmatpush1.msra.mxu0 0.0
          %635 = vmatprep.subr.mxu0 0.0
          %636 = vmatpush1.msra.mxu0 0.0
          %637 = vmatprep.subr.mxu0 0.0
          %638 = vmatpush1.msra.mxu0 0.0
          %639 = vmatprep.subr.mxu0 0.0
          %640 = vmatpush1.msra.mxu0 0.0
          %641 = vmatprep.subr.mxu0 0.0
          %642 = vmatpush1.msra.mxu0 0.0
          %643 = vmatprep.subr.mxu0 0.0
          %644 = vmatpush1.msra.mxu0 0.0
          %645 = vmatprep.subr.mxu0 0.0
          %646 = vmatpush1.msra.mxu0 0.0
          %647 = vmatprep.subr.mxu0 0.0
          %648 = vmatpush1.msra.mxu0 0.0
          %649 = vmatprep.subr.mxu0 0.0
          %650 = vmatpush1.msra.mxu0 0.0
          %651 = vmatprep.subr.mxu0 0.0
          %652 = vmatpush1.msra.mxu0 0.0
          %653 = vmatprep.subr.mxu0 0.0
          %654 = vmatpush1.msra.mxu0 0.0
          %655 = vmatprep.subr.mxu0 0.0
          %656 = vmatpush1.msra.mxu0 0.0
          %657 = vmatprep.subr.mxu0 0.0
          %658 = vmatpush1.msra.mxu0 0.0
          %659 = vmatprep.subr.mxu0 0.0
          %660 = vmatpush1.msra.mxu0 0.0
          %661 = vmatprep.mubr.f32.mxu0 0.0
          %662 = vmatmul.mubr.f32.gmra.mrb[0].mxu0 %v592
          %v663 = vpop.f32.mrb[0].mxu0
          %v664 = vadd.f32 0.0, %v663
          %v665 = vpop.f32.mrb[0].mxu0
          %666 = vmatprep.mubr.f32.mxu0 0.0
          %667 = vmatmul.mubr.f32.gmra.mrb[0].mxu0 %v595
          %v668 = vpop.f32.mrb[0].mxu0
          %v669 = vadd.f32 0.0, %v668
          %v670 = vpop.f32.mrb[0].mxu0
          %671 = vdwg.mxu0
          %v672 = vld [vmem:[#allocation13 + $0x3] sm:$0x1]
          %v673 = vld [vmem:[#allocation13 + $0x4] sm:$0x1]
          %v674 = vld [vmem:[#allocation13 + $0x5] sm:$0x1]
          %v675 = vld [vmem:[#allocation13 + $0x6] sm:$0x1]
          %v676 = vld [vmem:[#allocation5] sm:$0x1]
          %v677 = vmul.f32 %v676, 0.03125
          %v678 = vld [vmem:[#allocation6] sm:$0x1]
          %v679 = vmul.f32 %v678, 0.03125
          %v680 = vmul.f32 %v677, %v677
          %v681 = vsub.f32 %v679, %v680
          %v682 = vadd.f32 %v681, 1e-05
          %v683 = vrsqrt.pop %v682
          %v684 = vmul.f32 %v672, %v683
          %v685 = vmul.f32 %v677, %v684
          %v686 = vsub.f32 %v673, %v685
          %v687 = vlaneseq
          %v688 = vshrl.u32 %v687, 7
          %v689 = vsub.s32 0, %v688
          %v690 = vrot.slane %v684, %v689
          %v691 = vmul.f32 %v664, %v690
          %v692 = vmul.f32 %v669, %v690
          %v693 = vlaneseq
          %v694 = vshrl.u32 %v693, 7
          %v695 = vsub.s32 0, %v694
          %v696 = vrot.slane %v686, %v695
          %v697 = vadd.f32 %v691, %v696
          %v698 = vadd.f32 %v692, %v696
          %v699 = vmax.f32 %v697, 0.0
          %v700 = vmax.f32 %v698, 0.0
          %v701 = vlaneseq
          %v702 = vshrl.u32 %v701, 7
          %v703 = vsub.s32 0, %v702
          %v704 = vrot.slane %v674, %v703
          %v705 = vmul.f32 %v699, %v704
          %v706 = vmul.f32 %v700, %v704
          %v707 = vsel %vm590, %v705, 0.0
          %708 = vadd.xlane.f32.xlu0 %v707
          %v709 = vpop.xlane.xlu0 %708
          %v710 = vsel %vm590, %v706, 0.0
          %711 = vadd.xlane.f32.xlu0 %v710
          %v712 = vpop.xlane.xlu0 %711
          %v713 = vlaneseq
          %v714 = vshrl.u32 %v713, 7
          %v715 = vsub.s32 0, %v714
          %v716 = vrot.slane %v675, %v715
          %v717 = vadd.f32 %v709, %v716
          %v718 = vadd.f32 %v712, %v716
          %vm719 = vcmask 7168
          %720 = vst.msk [vmem:[%s277] sm:$0xff] %vm719, %v717
          %721 = vst.msk [vmem:[%s277 + $0x8] sm:$0xff] %vm719, %v718
        $region68: #{tpu_custom_call.1} parent=35 // pred_fallthru
          _
        %s722 = sand.u32 %s140, 1
        %s723 = scalar_lea.sflag [#allocation9], %s722
        %s724 = sand.u32 %s140, 1
        %s725 = smul.addr %s724, 16
        %s726 = scalar_lea.vmem [#allocation15], %s725
        // Predicated region
        $region69: #{tpu_custom_call.1} parent=35 // pred_check
          %p727 = pneg %p150
        $region70: #{tpu_custom_call.1} parent=35 // pred_check_branch
          %729 = sbr.rel (%p727) target = $region72
        $region71: #{tpu_custom_call.1} parent=35 // pred_region
          %p730 = scmp.eq.s32.totalorder %s27, 2
          %s731 = scalar_select %p730, %s28, 0
          %s732 = smul.u32 2, %s731
          %s734 = ssub.s32 256, 256
          %735 = vsyncadd %s723, %s734
          %s736 = smul.addr %s732, 128
          %s737 = scalar_lea.hbm %s4, %s736
          %s738 = sshll.u32 %s726, 4
          %s739 = int_to_ptr.vmem [resolvable:$true] %s738
          %744 = dma.vmem_to_hbm [thread:$0]  %s739, 256, %s737, %s723, 128, 128, 8
        $region72: #{tpu_custom_call.1} parent=35 // pred_fallthru
          _
      $region36: #{tpu_custom_call.1} parent=5 // pred_fallthru
        _
      %p745 = scmp.le.s32.totalorder 2, %s18
      // Predicated region
      $region73: #{tpu_custom_call.1} parent=5 // pred_check
        %p746 = pneg %p745
      $region74: #{tpu_custom_call.1} parent=5 // pred_check_branch
        %748 = sbr.rel (%p746) target = $region76
      $region75: #{tpu_custom_call.1} parent=5 // pred_region
        %s749 = ssub.s32 %s18, 2
        // Predicated region
        $region77: #{tpu_custom_call.1} parent=75 // pred_check
          %p750 = pneg %p156
        $region78: #{tpu_custom_call.1} parent=75 // pred_check_branch
          %752 = sbr.rel (%p750) target = $region80
        $region79: #{tpu_custom_call.1} parent=75 // pred_region
          %s753 = sand.u32 %s141, 1
          %s754 = scalar_lea.sflag [#allocation9], %s753
          %s755 = sand.u32 %s141, 1
          %s756 = smul.addr %s755, 16
          %s757 = scalar_lea.vmem [#allocation15], %s756
          %758 = dma.done %s754, 256
        $region80: #{tpu_custom_call.1} parent=75 // pred_fallthru
          _
      $region76: #{tpu_custom_call.1} parent=5 // pred_fallthru
        _
    $region6: #{tpu_custom_call.1} parent=1 // loop_footer
      %s22 = sadd.s32 1, %s18
    $region7: #{tpu_custom_call.1} parent=1 // loop_footer_branch
      %17 = sbr.rel target = $region3
    $region8: #{tpu_custom_call.1} parent=1 // loop_exit
      _
    %759 = vsyncpa [#allocation8], 1
    %s760 = scalar_lea.sflag [#allocation8], 1
    %761 = vsyncpa %s760, 1
    %762 = vsyncpa [#allocation11], 1
    %763 = vsyncpa [#allocation14], 1
    %764 = vsyncpa [#allocation9], 1
    %s765 = scalar_lea.sflag [#allocation9], 1
    %766 = vsyncpa %s765, 1

</llo_original>
